<compile_context>
chip_gen: v7x
topology: tpu7x:2x2x1
jax: 0.10.0
libtpu: 0.0.40
codegen_flags: <defaults>
</compile_context>

<pallas_src>
import math

import jax
import jax.numpy as jnp
from jax.experimental import pallas as pl
from jax.experimental.pallas import tpu as pltpu


def make_quaternion_mul(kernel: jax.Array) -> jax.Array:
    """JAX equivalent of the PyTorch helper (parameter-setup glue)."""
    dim = kernel.shape[1] // 4
    r, i, j, k = jnp.split(kernel, 4, axis=1)
    r2 = jnp.concatenate([r, -i, -j, -k], axis=0)
    i2 = jnp.concatenate([i, r, -k, j], axis=0)
    j2 = jnp.concatenate([j, k, r, -i], axis=0)
    k2 = jnp.concatenate([k, -j, i, r], axis=0)
    hamilton = jnp.concatenate([r2, i2, j2, k2], axis=1)
    assert kernel.shape[1] == hamilton.shape[1]
    return hamilton


def _make_gcn_q_kernel(batch_tile: int, node_n: int, has_bias: bool):
    """Kernel over one batch tile: refs are 2-D (rows = batch_tile*node_n)."""

    def kernel(x_ref, ham_ref, att_ref, *rest):
        if has_bias:
            bias_ref, out_ref = rest
        else:
            (out_ref,) = rest

        # One fat-M matmul for the whole batch tile:
        #   (Bt*N, 4*in_f) @ (4*in_f, out_f) with f32 accumulation.
        support = jnp.dot(x_ref[...], ham_ref[...],
                          preferred_element_type=jnp.float32)      # (Bt*N, out_f) f32

        att = att_ref[...]
        for b in range(batch_tile):  # static unroll; batch_tile is small
            # Keep the second matmul on the same (possibly bf16) MXU path.
            sup_b = support[b * node_n:(b + 1) * node_n, :].astype(att.dtype)
            ob = jnp.dot(att, sup_b, preferred_element_type=jnp.float32)
            if has_bias:
                ob = ob + bias_ref[...]                             # f32 VPU add
            out_ref[pl.ds(b * node_n, node_n), :] = ob.astype(out_ref.dtype)

    return kernel


def graph_convolution_q(x, weight, att, bias=None, *,
                        compute_dtype=None, batch_tile=None):
    """GraphConvolution_Q forward.

    x      : (B, node_n, 4*in_features)
    weight : (in_features, out_features), out_features divisible by 4
    att    : (node_n, node_n)
    bias   : (out_features,) or None
    compute_dtype : dtype of the MXU operands (x / hamilton / att).
        None -> keep x.dtype (exact module semantics, f32).
        jnp.bfloat16 -> recommended fast path on v6e/v7x (f32 accumulation kept).
    batch_tile : batch elements folded into one grid step.
        None -> whole batch in a single step (min per-step overhead; fine for
        v5e/v6e).  On v7x pass e.g. ceil(B/2) so both TensorCores get a
        "parallel" grid step.
    """
    B, N, Fin4 = x.shape
    in_f, out_f = weight.shape
    assert Fin4 == 4 * in_f
    assert att.shape == (N, N)

    out_dtype = x.dtype
    cd = out_dtype if compute_dtype is None else compute_dtype
    Bt = B if batch_tile is None else max(1, min(int(batch_tile), B))
    n_tiles = pl.cdiv(B, Bt)

    # Quaternion hamilton construction is cheap parameter glue; done in JAX.
    hamilton = make_quaternion_mul(weight).astype(cd)          # (4*in_f, out_f)
    x2d = x.reshape(B * N, Fin4).astype(cd)                    # free reshape
    att_c = att.astype(cd)

    has_bias = bias is not None
    operands = [x2d, hamilton, att_c]
    in_specs = [
        pl.BlockSpec((Bt * N, Fin4), lambda t: (t, 0)),        # per-tile rows of x
        pl.BlockSpec((Fin4, out_f), lambda t: (0, 0)),         # grid-invariant
        pl.BlockSpec((N, N), lambda t: (0, 0)),                # grid-invariant
    ]
    if has_bias:
        operands.append(bias.reshape(1, out_f).astype(jnp.float32))  # keep f32
        in_specs.append(pl.BlockSpec((1, out_f), lambda t: (0, 0)))

    out2d = pl.pallas_call(
        _make_gcn_q_kernel(Bt, N, has_bias),
        out_shape=jax.ShapeDtypeStruct((B * N, out_f), out_dtype),
        grid_spec=pltpu.PrefetchScalarGridSpec(
            num_scalar_prefetch=0,
            grid=(n_tiles,),
            in_specs=in_specs,
            out_specs=pl.BlockSpec((Bt * N, out_f), lambda t: (t, 0)),
        ),
        compiler_params=pltpu.CompilerParams(
            dimension_semantics=("parallel",)),
    )(*operands)

    return out2d.reshape(B, N, out_f)


if __name__ == "__main__":
    # Module config: in_features=8 -> input feature dim 32, out_features=32,
    # node_n=48, batch=2.
    in_features, out_features, node_n, batch = 8, 32, 48, 2

    key = jax.random.PRNGKey(0)
    k_w, k_a, k_b, k_x = jax.random.split(key, 4)

    stdv = math.sqrt(6.0 / (in_features + out_features))
    weight = jax.random.uniform(k_w, (in_features, out_features),
                                minval=-stdv, maxval=stdv, dtype=jnp.float32)
    att = jax.random.uniform(k_a, (node_n, node_n),
                             minval=-stdv, maxval=stdv, dtype=jnp.float32)
    bias = jax.random.uniform(k_b, (out_features,),
                              minval=-stdv, maxval=stdv, dtype=jnp.float32)
    x = jax.random.normal(k_x, (batch, node_n, 4 * in_features), dtype=jnp.float32)

    hamilton = make_quaternion_mul(weight)

    # 1) Exact f32 path (module semantics).
    out_f32 = jax.block_until_ready(
        graph_convolution_q(x, weight, att, bias, compute_dtype=jnp.float32))
    ref_f32 = jnp.matmul(att, jnp.matmul(x, hamilton)) + bias
    assert out_f32.shape == (batch, node_n, out_features)
    assert jnp.allclose(out_f32, ref_f32, atol=1e-5, rtol=1e-5)

    # 2) bf16-operand / f32-accumulate fast path (v6e / v7x MXU).  Reference
    #    mirrors the same operand rounding so the tolerance stays tight.
    out_bf16 = jax.block_until_ready(
        graph_convolution_q(x, weight, att, bias, compute_dtype=jnp.bfloat16))
    xb = x.astype(jnp.bfloat16)
    hb = hamilton.astype(jnp.bfloat16)
    ab = att.astype(jnp.bfloat16)
    sup = jnp.matmul(xb, hb, preferred_element_type=jnp.float32).astype(jnp.bfloat16)
    ref_bf16 = jnp.matmul(ab, sup, preferred_element_type=jnp.float32) + bias
    assert jnp.allclose(out_bf16, ref_bf16, atol=1e-2, rtol=1e-2)

    # 3) bias=None path (kernel built without a bias ref).
    out_nb = jax.block_until_ready(
        graph_convolution_q(x, weight, att, None, compute_dtype=jnp.float32))
    ref_nb = jnp.matmul(att, jnp.matmul(x, hamilton))
    assert jnp.allclose(out_nb, ref_nb, atol=1e-5, rtol=1e-5)

    print("KERNEL_OK")
</pallas_src>

<mosaic_0001>
module attributes {stable_mosaic.version = 11 : i64} {
  func.func @kernel(%arg0: i32, %arg1: memref<96x32xf32, #tpu.memory_space<vmem>>, %arg2: memref<32x32xf32, #tpu.memory_space<vmem>>, %arg3: memref<48x48xf32, #tpu.memory_space<vmem>>, %arg4: memref<1x32xf32, #tpu.memory_space<vmem>>, %arg5: memref<96x32xf32, #tpu.memory_space<vmem>>) attributes {dimension_semantics = [#tpu.dimension_semantics<parallel>], iteration_bounds = array<i64: 1>, scalar_prefetch = 0 : i64, scratch_operands = 0 : i64, tpu.core_type = #tpu.core_type<tc>, window_params = [{transform_indices = @transform_0, window_bounds = array<i64: 96, 32>}, {pipeline_mode = #tpu.pipeline_mode<synchronous>, transform_indices = @transform_1, window_bounds = array<i64: 32, 32>}, {pipeline_mode = #tpu.pipeline_mode<synchronous>, transform_indices = @transform_2, window_bounds = array<i64: 48, 48>}, {pipeline_mode = #tpu.pipeline_mode<synchronous>, transform_indices = @transform_3, window_bounds = array<i64: 1, 32>}, {transform_indices = @transform_4, window_bounds = array<i64: 96, 32>}]} {
    %c0 = arith.constant 0 : index
    %c0_0 = arith.constant 0 : index
    %0 = vector.load %arg1[%c0, %c0_0] : memref<96x32xf32, #tpu.memory_space<vmem>>, vector<96x32xf32>
    %c0_1 = arith.constant 0 : index
    %c0_2 = arith.constant 0 : index
    %1 = vector.load %arg2[%c0_1, %c0_2] : memref<32x32xf32, #tpu.memory_space<vmem>>, vector<32x32xf32>
    %cst = arith.constant dense<0.000000e+00> : vector<96x32xf32>
    %2 = tpu.matmul %0, %1, %cst {dimension_numbers = #tpu.dot_dimension_numbers<[1], [0], [0], [1], [0, 0, 1, 1], [], []>} : vector<96x32xf32>, vector<32x32xf32>, vector<96x32xf32> -> vector<96x32xf32>
    %c0_3 = arith.constant 0 : index
    %c0_4 = arith.constant 0 : index
    %3 = vector.load %arg3[%c0_3, %c0_4] : memref<48x48xf32, #tpu.memory_space<vmem>>, vector<48x48xf32>
    %4 = vector.extract_strided_slice %2 {offsets = [0, 0], sizes = [48, 32], strides = [1, 1]} : vector<96x32xf32> to vector<48x32xf32>
    %cst_5 = arith.constant dense<0.000000e+00> : vector<48x32xf32>
    %5 = tpu.matmul %3, %4, %cst_5 {dimension_numbers = #tpu.dot_dimension_numbers<[1], [0], [0], [1], [0, 0, 1, 1], [], []>} : vector<48x48xf32>, vector<48x32xf32>, vector<48x32xf32> -> vector<48x32xf32>
    %c0_6 = arith.constant 0 : index
    %c0_7 = arith.constant 0 : index
    %6 = vector.load %arg4[%c0_6, %c0_7] : memref<1x32xf32, #tpu.memory_space<vmem>>, vector<1x32xf32>
    %7 = vector.broadcast %6 : vector<1x32xf32> to vector<48x32xf32>
    %8 = arith.addf %5, %7 : vector<48x32xf32>
    %c0_8 = arith.constant 0 : index
    %c0_9 = arith.constant 0 : index
    %9 = vector.load %arg5[%c0_8, %c0_9] : memref<96x32xf32, #tpu.memory_space<vmem>>, vector<48x32xf32>
    tpu.vector_store %arg5[%c0_8, %c0_9], %8 {strides = array<i32>} : memref<96x32xf32, #tpu.memory_space<vmem>>, vector<48x32xf32>,
    %10 = vector.extract_strided_slice %2 {offsets = [48, 0], sizes = [48, 32], strides = [1, 1]} : vector<96x32xf32> to vector<48x32xf32>
    %cst_10 = arith.constant dense<0.000000e+00> : vector<48x32xf32>
    %11 = tpu.matmul %3, %10, %cst_10 {dimension_numbers = #tpu.dot_dimension_numbers<[1], [0], [0], [1], [0, 0, 1, 1], [], []>} : vector<48x48xf32>, vector<48x32xf32>, vector<48x32xf32> -> vector<48x32xf32>
    %c0_11 = arith.constant 0 : index
    %c0_12 = arith.constant 0 : index
    %12 = vector.load %arg4[%c0_11, %c0_12] : memref<1x32xf32, #tpu.memory_space<vmem>>, vector<1x32xf32>
    %13 = vector.broadcast %12 : vector<1x32xf32> to vector<48x32xf32>
    %14 = arith.addf %11, %13 : vector<48x32xf32>
    %c48 = arith.constant 48 : index
    %c0_13 = arith.constant 0 : index
    %15 = vector.load %arg5[%c48, %c0_13] : memref<96x32xf32, #tpu.memory_space<vmem>>, vector<48x32xf32>
    tpu.vector_store %arg5[%c48, %c0_13], %14 {strides = array<i32>} : memref<96x32xf32, #tpu.memory_space<vmem>>, vector<48x32xf32>,
    return
  }
  func.func @transform_0(%arg0: i32) -> (i32, i32) {
    %c0_i32 = arith.constant 0 : i32
    %c0_i32_0 = arith.constant 0 : i32
    return %arg0, %c0_i32 : i32, i32
  }
  func.func @transform_1(%arg0: i32) -> (i32, i32) {
    %c0_i32 = arith.constant 0 : i32
    %c0_i32_0 = arith.constant 0 : i32
    %c0_i32_1 = arith.constant 0 : i32
    return %c0_i32, %c0_i32_0 : i32, i32
  }
  func.func @transform_2(%arg0: i32) -> (i32, i32) {
    %c0_i32 = arith.constant 0 : i32
    %c0_i32_0 = arith.constant 0 : i32
    %c0_i32_1 = arith.constant 0 : i32
    return %c0_i32, %c0_i32_0 : i32, i32
  }
  func.func @transform_3(%arg0: i32) -> (i32, i32) {
    %c0_i32 = arith.constant 0 : i32
    %c0_i32_0 = arith.constant 0 : i32
    %c0_i32_1 = arith.constant 0 : i32
    return %c0_i32, %c0_i32_0 : i32, i32
  }
  func.func @transform_4(%arg0: i32) -> (i32, i32) {
    %c0_i32 = arith.constant 0 : i32
    %c0_i32_0 = arith.constant 0 : i32
    return %arg0, %c0_i32 : i32, i32
  }
}

</mosaic_0001>

<llo_original>
// kernel: tpu_custom_call.1
$region0: #{tpu_custom_call.1}
  #allocation0 [shape = 'u32[]', space=smem, size = 0x4, offset = 0x4, fixed_abs, tag = 'smem constant byte address 0x4 - core index']
  #allocation1 [shape = 'u32[144,128]{1,0:T(1,128)}', space=vmem, size = 0x12000, scoped, tag = 'internal scratch']
  %s0 = inlined_call_operand.vmem [shape: f32[96,32], index: 0, kind: input, shape index: {}]
  %s1 = inlined_call_operand.vmem [shape: f32[32,32], index: 1, kind: input, shape index: {}]
  %s2 = inlined_call_operand.vmem [shape: f32[48,48], index: 2, kind: input, shape index: {}]
  %s3 = inlined_call_operand.vmem [shape: f32[1,32], index: 3, kind: input, shape index: {}]
  %s4 = inlined_call_operand.vmem [shape: f32[96,32], index: 4, kind: output, shape index: {}]
  %s5 = sld [smem:[#allocation0]]
  $region26: #{tpu_custom_call.1} parent=0
    _
  %s7 = ssub.s32 1, %s5
  %s8 = scalar_select 0, %s7, %s5
  // Predicated region
  $region2: #{tpu_custom_call.1} parent=0 // pred_check
    _
  $region3: #{tpu_custom_call.1} parent=0 // pred_check_branch
    %10 = sbr.rel (0) target = $region5
  $region4: #{tpu_custom_call.1} parent=0 // pred_region
    _
  $region5: #{tpu_custom_call.1} parent=0 // pred_fallthru
    _
  // Predicated region
  $region6: #{tpu_custom_call.1} parent=0 // pred_check
    _
  $region7: #{tpu_custom_call.1} parent=0 // pred_check_branch
    %12 = sbr.rel (0) target = $region9
  $region8: #{tpu_custom_call.1} parent=0 // pred_region
    _
  $region9: #{tpu_custom_call.1} parent=0 // pred_fallthru
    _
  // Predicated region
  $region10: #{tpu_custom_call.1} parent=0 // pred_check
    _
  $region11: #{tpu_custom_call.1} parent=0 // pred_check_branch
    %14 = sbr.rel (0) target = $region13
  $region12: #{tpu_custom_call.1} parent=0 // pred_region
    _
  $region13: #{tpu_custom_call.1} parent=0 // pred_fallthru
    _
  // Predicated region
  $region14: #{tpu_custom_call.1} parent=0 // pred_check
    _
  $region15: #{tpu_custom_call.1} parent=0 // pred_check_branch
    %16 = sbr.rel (0) target = $region17
  $region16: #{tpu_custom_call.1} parent=0 // pred_region
    _
  $region17: #{tpu_custom_call.1} parent=0 // pred_fallthru
    _
  %v17 = vld [vmem:[%s0] sm:$0xff]
  %v18 = vld [vmem:[%s0 + $0x8] sm:$0xff]
  %v19 = vld [vmem:[%s0 + $0x10] sm:$0xff]
  %v20 = vld [vmem:[%s0 + $0x18] sm:$0xff]
  %v21 = vld [vmem:[%s0 + $0x20] sm:$0xff]
  %v22 = vld [vmem:[%s0 + $0x28] sm:$0xff]
  %v23 = vld [vmem:[%s0 + $0x30] sm:$0xff]
  %v24 = vld [vmem:[%s0 + $0x38] sm:$0xff]
  %v25 = vld [vmem:[%s0 + $0x40] sm:$0xff]
  %v26 = vld [vmem:[%s0 + $0x48] sm:$0xff]
  %v27 = vld [vmem:[%s0 + $0x50] sm:$0xff]
  %v28 = vld [vmem:[%s0 + $0x58] sm:$0xff]
  %v29 = vld [vmem:[%s1] sm:$0xff]
  %v30 = vld [vmem:[%s1 + $0x8] sm:$0xff]
  %v31 = vld [vmem:[%s1 + $0x10] sm:$0xff]
  %v32 = vld [vmem:[%s1 + $0x18] sm:$0xff]
  %vm33 = vcmask 261120
  %v35 = vsel %vm33, %v17, 0
  %v38 = vsel %vm33, %v18, 0
  %v41 = vsel %vm33, %v19, 0
  %v44 = vsel %vm33, %v20, 0
  %v47 = vsel %vm33, %v21, 0
  %v50 = vsel %vm33, %v22, 0
  %v53 = vsel %vm33, %v23, 0
  %v56 = vsel %vm33, %v24, 0
  %v59 = vsel %vm33, %v25, 0
  %v62 = vsel %vm33, %v26, 0
  %v65 = vsel %vm33, %v27, 0
  %v68 = vsel %vm33, %v28, 0
  %70 = vmatprep.subr.mxu0 0.0
  %71 = vmatpush1.msra.mxu0 %v29
  %72 = vmatprep.subr.mxu0 0.0
  %73 = vmatpush1.msra.mxu0 %v30
  %74 = vmatprep.subr.mxu0 0.0
  %75 = vmatpush1.msra.mxu0 %v31
  %76 = vmatprep.subr.mxu0 0.0
  %77 = vmatpush1.msra.mxu0 %v32
  %78 = vmatprep.subr.mxu0 0.0
  %79 = vmatpush1.msra.mxu0 0.0
  %80 = vmatprep.subr.mxu0 0.0
  %81 = vmatpush1.msra.mxu0 0.0
  %82 = vmatprep.subr.mxu0 0.0
  %83 = vmatpush1.msra.mxu0 0.0
  %84 = vmatprep.subr.mxu0 0.0
  %85 = vmatpush1.msra.mxu0 0.0
  %86 = vmatprep.subr.mxu0 0.0
  %87 = vmatpush1.msra.mxu0 0.0
  %88 = vmatprep.subr.mxu0 0.0
  %89 = vmatpush1.msra.mxu0 0.0
  %90 = vmatprep.subr.mxu0 0.0
  %91 = vmatpush1.msra.mxu0 0.0
  %92 = vmatprep.subr.mxu0 0.0
  %93 = vmatpush1.msra.mxu0 0.0
  %94 = vmatprep.subr.mxu0 0.0
  %95 = vmatpush1.msra.mxu0 0.0
  %96 = vmatprep.subr.mxu0 0.0
  %97 = vmatpush1.msra.mxu0 0.0
  %98 = vmatprep.subr.mxu0 0.0
  %99 = vmatpush1.msra.mxu0 0.0
  %100 = vmatprep.subr.mxu0 0.0
  %101 = vmatpush1.msra.mxu0 0.0
  %102 = vmatprep.subr.mxu0 0.0
  %103 = vmatpush1.msra.mxu0 0.0
  %104 = vmatprep.subr.mxu0 0.0
  %105 = vmatpush1.msra.mxu0 0.0
  %106 = vmatprep.subr.mxu0 0.0
  %107 = vmatpush1.msra.mxu0 0.0
  %108 = vmatprep.subr.mxu0 0.0
  %109 = vmatpush1.msra.mxu0 0.0
  %110 = vmatprep.subr.mxu0 0.0
  %111 = vmatpush1.msra.mxu0 0.0
  %112 = vmatprep.subr.mxu0 0.0
  %113 = vmatpush1.msra.mxu0 0.0
  %114 = vmatprep.subr.mxu0 0.0
  %115 = vmatpush1.msra.mxu0 0.0
  %116 = vmatprep.subr.mxu0 0.0
  %117 = vmatpush1.msra.mxu0 0.0
  %118 = vmatprep.subr.mxu0 0.0
  %119 = vmatpush1.msra.mxu0 0.0
  %120 = vmatprep.subr.mxu0 0.0
  %121 = vmatpush1.msra.mxu0 0.0
  %122 = vmatprep.subr.mxu0 0.0
  %123 = vmatpush1.msra.mxu0 0.0
  %124 = vmatprep.subr.mxu0 0.0
  %125 = vmatpush1.msra.mxu0 0.0
  %126 = vmatprep.subr.mxu0 0.0
  %127 = vmatpush1.msra.mxu0 0.0
  %128 = vmatprep.subr.mxu0 0.0
  %129 = vmatpush1.msra.mxu0 0.0
  %130 = vmatprep.subr.mxu0 0.0
  %131 = vmatpush1.msra.mxu0 0.0
  %132 = vmatprep.subr.mxu0 0.0
  %133 = vmatpush1.msra.mxu0 0.0
  %134 = vmatprep.mubr.f32.mxu0 0.0
  %135 = vmatmul.mubr.f32.gmra.mrb[0].mxu0 %v35
  %v136 = vpop.f32.mrb[0].mxu0
  %v137 = vadd.f32 0.0, %v136
  %v138 = vpop.f32.mrb[0].mxu0
  %139 = vmatprep.mubr.f32.mxu0 0.0
  %140 = vmatmul.mubr.f32.gmra.mrb[0].mxu0 %v38
  %v141 = vpop.f32.mrb[0].mxu0
  %v142 = vadd.f32 0.0, %v141
  %v143 = vpop.f32.mrb[0].mxu0
  %144 = vmatprep.mubr.f32.mxu0 0.0
  %145 = vmatmul.mubr.f32.gmra.mrb[0].mxu0 %v41
  %v146 = vpop.f32.mrb[0].mxu0
  %v147 = vadd.f32 0.0, %v146
  %v148 = vpop.f32.mrb[0].mxu0
  %149 = vmatprep.mubr.f32.mxu0 0.0
  %150 = vmatmul.mubr.f32.gmra.mrb[0].mxu0 %v44
  %v151 = vpop.f32.mrb[0].mxu0
  %v152 = vadd.f32 0.0, %v151
  %v153 = vpop.f32.mrb[0].mxu0
  %154 = vmatprep.mubr.f32.mxu0 0.0
  %155 = vmatmul.mubr.f32.gmra.mrb[0].mxu0 %v47
  %v156 = vpop.f32.mrb[0].mxu0
  %v157 = vadd.f32 0.0, %v156
  %v158 = vpop.f32.mrb[0].mxu0
  %159 = vmatprep.mubr.f32.mxu0 0.0
  %160 = vmatmul.mubr.f32.gmra.mrb[0].mxu0 %v50
  %v161 = vpop.f32.mrb[0].mxu0
  %v162 = vadd.f32 0.0, %v161
  %v163 = vpop.f32.mrb[0].mxu0
  %164 = vmatprep.mubr.f32.mxu0 0.0
  %165 = vmatmul.mubr.f32.gmra.mrb[0].mxu0 %v53
  %v166 = vpop.f32.mrb[0].mxu0
  %v167 = vadd.f32 0.0, %v166
  %v168 = vpop.f32.mrb[0].mxu0
  %169 = vmatprep.mubr.f32.mxu0 0.0
  %170 = vmatmul.mubr.f32.gmra.mrb[0].mxu0 %v56
  %v171 = vpop.f32.mrb[0].mxu0
  %v172 = vadd.f32 0.0, %v171
  %v173 = vpop.f32.mrb[0].mxu0
  %174 = vmatprep.mubr.f32.mxu0 0.0
  %175 = vmatmul.mubr.f32.gmra.mrb[0].mxu0 %v59
  %v176 = vpop.f32.mrb[0].mxu0
  %v177 = vadd.f32 0.0, %v176
  %v178 = vpop.f32.mrb[0].mxu0
  %179 = vmatprep.mubr.f32.mxu0 0.0
  %180 = vmatmul.mubr.f32.gmra.mrb[0].mxu0 %v62
  %v181 = vpop.f32.mrb[0].mxu0
  %v182 = vadd.f32 0.0, %v181
  %v183 = vpop.f32.mrb[0].mxu0
  %184 = vmatprep.mubr.f32.mxu0 0.0
  %185 = vmatmul.mubr.f32.gmra.mrb[0].mxu0 %v65
  %v186 = vpop.f32.mrb[0].mxu0
  %v187 = vadd.f32 0.0, %v186
  %v188 = vpop.f32.mrb[0].mxu0
  %189 = vmatprep.mubr.f32.mxu0 0.0
  %190 = vmatmul.mubr.f32.gmra.mrb[0].mxu0 %v68
  %v191 = vpop.f32.mrb[0].mxu0
  %v192 = vadd.f32 0.0, %v191
  %v193 = vpop.f32.mrb[0].mxu0
  %194 = vdwg.mxu0
  %v195 = vld [vmem:[%s2] sm:$0xff]
  %v196 = vld [vmem:[%s2 + $0x8] sm:$0xff]
  %v197 = vld [vmem:[%s2 + $0x10] sm:$0xff]
  %v198 = vld [vmem:[%s2 + $0x18] sm:$0xff]
  %v199 = vld [vmem:[%s2 + $0x20] sm:$0xff]
  %v200 = vld [vmem:[%s2 + $0x28] sm:$0xff]
  %v201 = vld [vmem:[%s3] sm:$0x1]
  %v203 = vlaneseq
  %v204 = vshrl.u32 %v203, 7
  %v205 = vsub.s32 0, %v204
  %v206 = vrot.slane %v201, %v205
  %vm208 = vcmask 392192
  %v210 = vsel %vm208, %v195, 0
  %v213 = vsel %vm208, %v196, 0
  %v216 = vsel %vm208, %v197, 0
  %v219 = vsel %vm208, %v198, 0
  %v222 = vsel %vm208, %v199, 0
  %v225 = vsel %vm208, %v200, 0
  %227 = vmatprep.subr.mxu0 0.0
  %228 = vmatpush1.msra.mxu0 %v137
  %229 = vmatprep.subr.mxu0 0.0
  %230 = vmatpush1.msra.mxu0 %v142
  %231 = vmatprep.subr.mxu0 0.0
  %232 = vmatpush1.msra.mxu0 %v147
  %233 = vmatprep.subr.mxu0 0.0
  %234 = vmatpush1.msra.mxu0 %v152
  %235 = vmatprep.subr.mxu0 0.0
  %236 = vmatpush1.msra.mxu0 %v157
  %237 = vmatprep.subr.mxu0 0.0
  %238 = vmatpush1.msra.mxu0 %v162
  %239 = vmatprep.subr.mxu0 0.0
  %240 = vmatpush1.msra.mxu0 0.0
  %241 = vmatprep.subr.mxu0 0.0
  %242 = vmatpush1.msra.mxu0 0.0
  %243 = vmatprep.subr.mxu0 0.0
  %244 = vmatpush1.msra.mxu0 0.0
  %245 = vmatprep.subr.mxu0 0.0
  %246 = vmatpush1.msra.mxu0 0.0
  %247 = vmatprep.subr.mxu0 0.0
  %248 = vmatpush1.msra.mxu0 0.0
  %249 = vmatprep.subr.mxu0 0.0
  %250 = vmatpush1.msra.mxu0 0.0
  %251 = vmatprep.subr.mxu0 0.0
  %252 = vmatpush1.msra.mxu0 0.0
  %253 = vmatprep.subr.mxu0 0.0
  %254 = vmatpush1.msra.mxu0 0.0
  %255 = vmatprep.subr.mxu0 0.0
  %256 = vmatpush1.msra.mxu0 0.0
  %257 = vmatprep.subr.mxu0 0.0
  %258 = vmatpush1.msra.mxu0 0.0
  %259 = vmatprep.subr.mxu0 0.0
  %260 = vmatpush1.msra.mxu0 0.0
  %261 = vmatprep.subr.mxu0 0.0
  %262 = vmatpush1.msra.mxu0 0.0
  %263 = vmatprep.subr.mxu0 0.0
  %264 = vmatpush1.msra.mxu0 0.0
  %265 = vmatprep.subr.mxu0 0.0
  %266 = vmatpush1.msra.mxu0 0.0
  %267 = vmatprep.subr.mxu0 0.0
  %268 = vmatpush1.msra.mxu0 0.0
  %269 = vmatprep.subr.mxu0 0.0
  %270 = vmatpush1.msra.mxu0 0.0
  %271 = vmatprep.subr.mxu0 0.0
  %272 = vmatpush1.msra.mxu0 0.0
  %273 = vmatprep.subr.mxu0 0.0
  %274 = vmatpush1.msra.mxu0 0.0
  %275 = vmatprep.subr.mxu0 0.0
  %276 = vmatpush1.msra.mxu0 0.0
  %277 = vmatprep.subr.mxu0 0.0
  %278 = vmatpush1.msra.mxu0 0.0
  %279 = vmatprep.subr.mxu0 0.0
  %280 = vmatpush1.msra.mxu0 0.0
  %281 = vmatprep.subr.mxu0 0.0
  %282 = vmatpush1.msra.mxu0 0.0
  %283 = vmatprep.subr.mxu0 0.0
  %284 = vmatpush1.msra.mxu0 0.0
  %285 = vmatprep.subr.mxu0 0.0
  %286 = vmatpush1.msra.mxu0 0.0
  %287 = vmatprep.subr.mxu0 0.0
  %288 = vmatpush1.msra.mxu0 0.0
  %289 = vmatprep.subr.mxu0 0.0
  %290 = vmatpush1.msra.mxu0 0.0
  %291 = vmatprep.mubr.f32.mxu0 0.0
  %292 = vmatmul.mubr.f32.gmra.mrb[0].mxu0 %v210
  %v293 = vpop.f32.mrb[0].mxu0
  %v294 = vadd.f32 %v206, %v293
  %v295 = vpop.f32.mrb[0].mxu0
  %296 = vmatprep.mubr.f32.mxu0 0.0
  %297 = vmatmul.mubr.f32.gmra.mrb[0].mxu0 %v213
  %v298 = vpop.f32.mrb[0].mxu0
  %v299 = vadd.f32 %v206, %v298
  %v300 = vpop.f32.mrb[0].mxu0
  %301 = vmatprep.mubr.f32.mxu0 0.0
  %302 = vmatmul.mubr.f32.gmra.mrb[0].mxu0 %v216
  %v303 = vpop.f32.mrb[0].mxu0
  %v304 = vadd.f32 %v206, %v303
  %v305 = vpop.f32.mrb[0].mxu0
  %306 = vmatprep.mubr.f32.mxu0 0.0
  %307 = vmatmul.mubr.f32.gmra.mrb[0].mxu0 %v219
  %v308 = vpop.f32.mrb[0].mxu0
  %v309 = vadd.f32 %v206, %v308
  %v310 = vpop.f32.mrb[0].mxu0
  %311 = vmatprep.mubr.f32.mxu0 0.0
  %312 = vmatmul.mubr.f32.gmra.mrb[0].mxu0 %v222
  %v313 = vpop.f32.mrb[0].mxu0
  %v314 = vadd.f32 %v206, %v313
  %v315 = vpop.f32.mrb[0].mxu0
  %316 = vmatprep.mubr.f32.mxu0 0.0
  %317 = vmatmul.mubr.f32.gmra.mrb[0].mxu0 %v225
  %v318 = vpop.f32.mrb[0].mxu0
  %v319 = vadd.f32 %v206, %v318
  %v320 = vpop.f32.mrb[0].mxu0
  %321 = vdwg.mxu0
  %322 = vst.msk [vmem:[%s4] sm:$0xff] %vm33, %v294
  %323 = vst.msk [vmem:[%s4 + $0x8] sm:$0xff] %vm33, %v299
  %324 = vst.msk [vmem:[%s4 + $0x10] sm:$0xff] %vm33, %v304
  %325 = vst.msk [vmem:[%s4 + $0x18] sm:$0xff] %vm33, %v309
  %326 = vst.msk [vmem:[%s4 + $0x20] sm:$0xff] %vm33, %v314
  %327 = vst.msk [vmem:[%s4 + $0x28] sm:$0xff] %vm33, %v319
  %v328 = vld [vmem:[%s3] sm:$0x1]
  %v330 = vlaneseq
  %v331 = vshrl.u32 %v330, 7
  %v332 = vsub.s32 0, %v331
  %v333 = vrot.slane %v328, %v332
  %335 = vmatprep.subr.mxu0 0.0
  %336 = vmatpush1.msra.mxu0 %v167
  %337 = vmatprep.subr.mxu0 0.0
  %338 = vmatpush1.msra.mxu0 %v172
  %339 = vmatprep.subr.mxu0 0.0
  %340 = vmatpush1.msra.mxu0 %v177
  %341 = vmatprep.subr.mxu0 0.0
  %342 = vmatpush1.msra.mxu0 %v182
  %343 = vmatprep.subr.mxu0 0.0
  %344 = vmatpush1.msra.mxu0 %v187
  %345 = vmatprep.subr.mxu0 0.0
  %346 = vmatpush1.msra.mxu0 %v192
  %347 = vmatprep.subr.mxu0 0.0
  %348 = vmatpush1.msra.mxu0 0.0
  %349 = vmatprep.subr.mxu0 0.0
  %350 = vmatpush1.msra.mxu0 0.0
  %351 = vmatprep.subr.mxu0 0.0
  %352 = vmatpush1.msra.mxu0 0.0
  %353 = vmatprep.subr.mxu0 0.0
  %354 = vmatpush1.msra.mxu0 0.0
  %355 = vmatprep.subr.mxu0 0.0
  %356 = vmatpush1.msra.mxu0 0.0
  %357 = vmatprep.subr.mxu0 0.0
  %358 = vmatpush1.msra.mxu0 0.0
  %359 = vmatprep.subr.mxu0 0.0
  %360 = vmatpush1.msra.mxu0 0.0
  %361 = vmatprep.subr.mxu0 0.0
  %362 = vmatpush1.msra.mxu0 0.0
  %363 = vmatprep.subr.mxu0 0.0
  %364 = vmatpush1.msra.mxu0 0.0
  %365 = vmatprep.subr.mxu0 0.0
  %366 = vmatpush1.msra.mxu0 0.0
  %367 = vmatprep.subr.mxu0 0.0
  %368 = vmatpush1.msra.mxu0 0.0
  %369 = vmatprep.subr.mxu0 0.0
  %370 = vmatpush1.msra.mxu0 0.0
  %371 = vmatprep.subr.mxu0 0.0
  %372 = vmatpush1.msra.mxu0 0.0
  %373 = vmatprep.subr.mxu0 0.0
  %374 = vmatpush1.msra.mxu0 0.0
  %375 = vmatprep.subr.mxu0 0.0
  %376 = vmatpush1.msra.mxu0 0.0
  %377 = vmatprep.subr.mxu0 0.0
  %378 = vmatpush1.msra.mxu0 0.0
  %379 = vmatprep.subr.mxu0 0.0
  %380 = vmatpush1.msra.mxu0 0.0
  %381 = vmatprep.subr.mxu0 0.0
  %382 = vmatpush1.msra.mxu0 0.0
  %383 = vmatprep.subr.mxu0 0.0
  %384 = vmatpush1.msra.mxu0 0.0
  %385 = vmatprep.subr.mxu0 0.0
  %386 = vmatpush1.msra.mxu0 0.0
  %387 = vmatprep.subr.mxu0 0.0
  %388 = vmatpush1.msra.mxu0 0.0
  %389 = vmatprep.subr.mxu0 0.0
  %390 = vmatpush1.msra.mxu0 0.0
  %391 = vmatprep.subr.mxu0 0.0
  %392 = vmatpush1.msra.mxu0 0.0
  %393 = vmatprep.subr.mxu0 0.0
  %394 = vmatpush1.msra.mxu0 0.0
  %395 = vmatprep.subr.mxu0 0.0
  %396 = vmatpush1.msra.mxu0 0.0
  %397 = vmatprep.subr.mxu0 0.0
  %398 = vmatpush1.msra.mxu0 0.0
  %399 = vmatprep.mubr.f32.mxu0 0.0
  %400 = vmatmul.mubr.f32.gmra.mrb[0].mxu0 %v210
  %v401 = vpop.f32.mrb[0].mxu0
  %v402 = vadd.f32 %v333, %v401
  %v403 = vpop.f32.mrb[0].mxu0
  %404 = vmatprep.mubr.f32.mxu0 0.0
  %405 = vmatmul.mubr.f32.gmra.mrb[0].mxu0 %v213
  %v406 = vpop.f32.mrb[0].mxu0
  %v407 = vadd.f32 %v333, %v406
  %v408 = vpop.f32.mrb[0].mxu0
  %409 = vmatprep.mubr.f32.mxu0 0.0
  %410 = vmatmul.mubr.f32.gmra.mrb[0].mxu0 %v216
  %v411 = vpop.f32.mrb[0].mxu0
  %v412 = vadd.f32 %v333, %v411
  %v413 = vpop.f32.mrb[0].mxu0
  %414 = vmatprep.mubr.f32.mxu0 0.0
  %415 = vmatmul.mubr.f32.gmra.mrb[0].mxu0 %v219
  %v416 = vpop.f32.mrb[0].mxu0
  %v417 = vadd.f32 %v333, %v416
  %v418 = vpop.f32.mrb[0].mxu0
  %419 = vmatprep.mubr.f32.mxu0 0.0
  %420 = vmatmul.mubr.f32.gmra.mrb[0].mxu0 %v222
  %v421 = vpop.f32.mrb[0].mxu0
  %v422 = vadd.f32 %v333, %v421
  %v423 = vpop.f32.mrb[0].mxu0
  %424 = vmatprep.mubr.f32.mxu0 0.0
  %425 = vmatmul.mubr.f32.gmra.mrb[0].mxu0 %v225
  %v426 = vpop.f32.mrb[0].mxu0
  %v427 = vadd.f32 %v333, %v426
  %v428 = vpop.f32.mrb[0].mxu0
  %429 = vdwg.mxu0
  %430 = vst.msk [vmem:[%s4 + $0x30] sm:$0xff] %vm33, %v402
  %431 = vst.msk [vmem:[%s4 + $0x38] sm:$0xff] %vm33, %v407
  %432 = vst.msk [vmem:[%s4 + $0x40] sm:$0xff] %vm33, %v412
  %433 = vst.msk [vmem:[%s4 + $0x48] sm:$0xff] %vm33, %v417
  %434 = vst.msk [vmem:[%s4 + $0x50] sm:$0xff] %vm33, %v422
  %435 = vst.msk [vmem:[%s4 + $0x58] sm:$0xff] %vm33, %v427
  // Predicated region
  $region18: #{tpu_custom_call.1} parent=0 // pred_check
    _
  $region19: #{tpu_custom_call.1} parent=0 // pred_check_branch
    %437 = sbr.rel (0) target = $region21
  $region20: #{tpu_custom_call.1} parent=0 // pred_region
    _
  $region21: #{tpu_custom_call.1} parent=0 // pred_fallthru
    _
  // Predicated region
  $region22: #{tpu_custom_call.1} parent=0 // pred_check
    _
  $region23: #{tpu_custom_call.1} parent=0 // pred_check_branch
    %439 = sbr.rel (0) target = $region25
  $region24: #{tpu_custom_call.1} parent=0 // pred_region
    _
  $region25: #{tpu_custom_call.1} parent=0 // pred_fallthru
    _

</llo_original>
